<compile_context>
chip_gen: v5e
topology: v5e:2x2
jax: 0.10.0
libtpu: 0.0.40
codegen_flags: <defaults>
</compile_context>

<pallas_src>
import math

import jax
import jax.numpy as jnp
from jax import lax
from jax.experimental import pallas as pl
from jax.experimental.pallas import tpu as pltpu


def _round_up(x, n):
    return ((x + n - 1) // n) * n


def _pick_tile(dim, target, align):
    """Largest `align`-aligned tile <= target that divides dim; falls back to
    the full dimension (a full-extent block is always a valid BlockSpec)."""
    if dim <= target:
        return dim
    t = (target // align) * align
    while t >= align:
        if dim % t == 0:
            return t
        t -= align
    return dim  # TODO(synk): pad in/out dims instead of full-extent fallback.


def _linearlr_kernel(x_ref, wu_ref, wv_ref, wres_ref, b_ref, o_ref,
                     acc_ref, h_ref):
    j = pl.program_id(1)
    k = pl.program_id(2)
    nk = pl.num_programs(2)

    @pl.when(k == 0)
    def _():
        acc_ref[...] = jnp.zeros_like(acc_ref)

    @pl.when((j == 0) & (k == 0))
    def _():
        h_ref[...] = jnp.zeros_like(h_ref)

    x = x_ref[...]

    # Residual path: x @ Wres^T accumulated over k.  Wres tile is (tn, tk) in
    # its native (out, in) layout; contract the last dims via dot_general.
    acc_ref[...] += lax.dot_general(
        x, wres_ref[...], (((1,), (1,)), ((), ())),
        preferred_element_type=jnp.float32)

    # Low-rank u-projection: h = x @ Wu^T accumulated over k, computed only on
    # the first output tile (j == 0) of each row tile and reused afterwards.
    @pl.when(j == 0)
    def _():
        h_ref[...] += lax.dot_general(
            x, wu_ref[...], (((1,), (1,)), ((), ())),
            preferred_element_type=jnp.float32)

    # Epilogue: add the v-projection of the (now complete) h plus bias and
    # write the tile out exactly once (single store; friendly to v5e's 1 vst).
    @pl.when(k == nk - 1)
    def _():
        low = lax.dot_general(
            h_ref[...], wv_ref[...], (((1,), (1,)), ((), ())),
            preferred_element_type=jnp.float32)
        o_ref[...] = (acc_ref[...] + low + b_ref[...]).astype(o_ref.dtype)


def linear_lr(x, wu, wv, wres, bias, *, tm=256, tn=512, tk=512):
    """LinearLR forward.

    x:    (..., in_features)
    wu:   (rank, in_features)       u.weight
    wv:   (out_features, rank)      v.weight
    wres: (out_features, in)        res.weight
    bias: (out_features,)           v.bias
    """
    in_features = x.shape[-1]
    out_features, rank = wv.shape
    lead = x.shape[:-1]
    m = math.prod(lead) if lead else 1
    x2 = x.reshape(m, in_features)

    # Pad rank to a lane-dense multiple of 128 (zeros leave results unchanged).
    rank_p = max(128, _round_up(rank, 128))
    if rank_p != rank:
        wu = jnp.pad(wu, ((0, rank_p - rank), (0, 0)))
        wv = jnp.pad(wv, ((0, 0), (0, rank_p - rank)))
    b2 = bias.reshape(1, out_features)

    # Tile sizes (full-extent blocks for small dims).
    tm = m if m <= tm else tm
    tn = _pick_tile(out_features, tn, 128)
    tk = _pick_tile(in_features, tk, 128)

    # Pad the row dimension so tm divides it (extra zero rows sliced off below).
    m_pad = _round_up(m, tm)
    if m_pad != m:
        x2 = jnp.pad(x2, ((0, m_pad - m), (0, 0)))

    grid = (m_pad // tm, out_features // tn, in_features // tk)

    dt_bytes = jnp.dtype(x.dtype).itemsize
    cost = pl.CostEstimate(
        flops=2 * m * in_features * out_features
        + 2 * m * rank_p * (in_features + out_features),
        transcendentals=0,
        bytes_accessed=dt_bytes * (x2.size + wu.size + wv.size + wres.size
                                   + bias.size + m_pad * out_features),
    )

    out = pl.pallas_call(
        _linearlr_kernel,
        out_shape=jax.ShapeDtypeStruct((m_pad, out_features), x.dtype),
        grid_spec=pltpu.PrefetchScalarGridSpec(
            num_scalar_prefetch=0,
            grid=grid,
            in_specs=[
                pl.BlockSpec((tm, tk), lambda i, j, k: (i, k)),        # x
                pl.BlockSpec((rank_p, tk), lambda i, j, k: (0, k)),    # Wu
                pl.BlockSpec((tn, rank_p), lambda i, j, k: (j, 0)),    # Wv
                pl.BlockSpec((tn, tk), lambda i, j, k: (j, k)),        # Wres
                pl.BlockSpec((1, tn), lambda i, j, k: (0, j)),         # bias
            ],
            out_specs=pl.BlockSpec((tm, tn), lambda i, j, k: (i, j)),
            scratch_shapes=[
                pltpu.VMEM((tm, tn), jnp.float32),      # residual accumulator
                pltpu.VMEM((tm, rank_p), jnp.float32),  # cached h = x @ Wu^T
            ],
        ),
        compiler_params=pltpu.CompilerParams(
            dimension_semantics=("parallel", "arbitrary", "arbitrary")),
        cost_estimate=cost,
    )(x2, wu, wv, wres, b2)

    return out[:m].reshape(*lead, out_features)


def init_linearlr_params(key, in_features, out_features, rank_ratio=0.25,
                         dtype=jnp.float32):
    """Deterministic init mimicking nn.Linear's default uniform(-1/sqrt(fan_in), +)."""
    rank = int(min(in_features, out_features) * rank_ratio)
    ku, kv, kb, kr = jax.random.split(key, 4)

    def _unif(k, shape, fan_in):
        bound = 1.0 / jnp.sqrt(jnp.asarray(fan_in, jnp.float32))
        return jax.random.uniform(k, shape, dtype, -bound, bound)

    wu = _unif(ku, (rank, in_features), in_features)             # u.weight
    wv = _unif(kv, (out_features, rank), rank)                   # v.weight
    bv = _unif(kb, (out_features,), rank)                        # v.bias
    wres = _unif(kr, (out_features, in_features), in_features)   # res.weight
    return wu, wv, bv, wres


if __name__ == "__main__":
    key = jax.random.PRNGKey(0)
    kx, kp = jax.random.split(key)

    batch, seq = 2, 8
    in_features, out_features = 32, 32   # rank = int(32 * 0.25) = 8

    x = jax.random.normal(kx, (batch, seq, in_features), dtype=jnp.float32)
    wu, wv, bv, wres = init_linearlr_params(kp, in_features, out_features)

    y = linear_lr(x, wu, wv, wres, bv)
    y = jax.block_until_ready(y)

    # Pure-JAX reference check.
    y_ref = (x @ wu.T) @ wv.T + bv + x @ wres.T
    assert y.shape == (batch, seq, out_features)
    assert jnp.allclose(y, y_ref, atol=1e-5, rtol=1e-5)

    print("KERNEL_OK")
</pallas_src>

<mosaic_0001>
module attributes {stable_mosaic.version = 11 : i64} {
  func.func @_linearlr_kernel(%arg0: i32, %arg1: i32, %arg2: i32, %arg3: memref<16x32xf32, #tpu.memory_space<vmem>>, %arg4: memref<128x32xf32, #tpu.memory_space<vmem>>, %arg5: memref<32x128xf32, #tpu.memory_space<vmem>>, %arg6: memref<32x32xf32, #tpu.memory_space<vmem>>, %arg7: memref<1x32xf32, #tpu.memory_space<vmem>>, %arg8: memref<16x32xf32, #tpu.memory_space<vmem>>, %arg9: memref<16x32xf32, #tpu.memory_space<vmem>>, %arg10: memref<16x128xf32, #tpu.memory_space<vmem>>) attributes {dimension_semantics = [#tpu.dimension_semantics<parallel>, #tpu.dimension_semantics<arbitrary>, #tpu.dimension_semantics<arbitrary>], iteration_bounds = array<i64: 1, 1, 1>, scalar_prefetch = 0 : i64, scratch_operands = 2 : i64, tpu.core_type = #tpu.core_type<tc>, window_params = [{transform_indices = @transform_0, window_bounds = array<i64: 16, 32>}, {transform_indices = @transform_1, window_bounds = array<i64: 128, 32>}, {transform_indices = @transform_2, window_bounds = array<i64: 32, 128>}, {transform_indices = @transform_3, window_bounds = array<i64: 32, 32>}, {transform_indices = @transform_4, window_bounds = array<i64: 1, 32>}, {transform_indices = @transform_5, window_bounds = array<i64: 16, 32>}]} {
    %c0_i32 = arith.constant 0 : i32
    %0 = arith.cmpi eq, %arg2, %c0_i32 : i32
    %1 = arith.extui %0 : i1 to i32
    %c0_i32_0 = arith.constant 0 : i32
    %2 = arith.cmpi ne, %1, %c0_i32_0 : i32
    scf.if %2 {
      %cst_15 = arith.constant 0.000000e+00 : f32
      %20 = vector.broadcast %cst_15 : f32 to vector<16x32xf32>
      %c0_16 = arith.constant 0 : index
      %c0_17 = arith.constant 0 : index
      %21 = vector.load %arg9[%c0_16, %c0_17] : memref<16x32xf32, #tpu.memory_space<vmem>>, vector<16x32xf32>
      tpu.vector_store %arg9[%c0_16, %c0_17], %20 {strides = array<i32>} : memref<16x32xf32, #tpu.memory_space<vmem>>, vector<16x32xf32>,
    } else {
    }
    %c0_i32_1 = arith.constant 0 : i32
    %3 = arith.cmpi eq, %arg1, %c0_i32_1 : i32
    %c0_i32_2 = arith.constant 0 : i32
    %4 = arith.cmpi eq, %arg2, %c0_i32_2 : i32
    %5 = arith.andi %3, %4 : i1
    %6 = arith.extui %5 : i1 to i32
    %c0_i32_3 = arith.constant 0 : i32
    %7 = arith.cmpi ne, %6, %c0_i32_3 : i32
    scf.if %7 {
      %cst_15 = arith.constant 0.000000e+00 : f32
      %20 = vector.broadcast %cst_15 : f32 to vector<16x128xf32>
      %c0_16 = arith.constant 0 : index
      %c0_17 = arith.constant 0 : index
      %21 = vector.load %arg10[%c0_16, %c0_17] : memref<16x128xf32, #tpu.memory_space<vmem>>, vector<16x128xf32>
      tpu.vector_store %arg10[%c0_16, %c0_17], %20 {strides = array<i32>} : memref<16x128xf32, #tpu.memory_space<vmem>>, vector<16x128xf32>,
    } else {
    }
    %c0 = arith.constant 0 : index
    %c0_4 = arith.constant 0 : index
    %8 = vector.load %arg3[%c0, %c0_4] : memref<16x32xf32, #tpu.memory_space<vmem>>, vector<16x32xf32>
    %c0_5 = arith.constant 0 : index
    %c0_6 = arith.constant 0 : index
    %9 = vector.load %arg9[%c0_5, %c0_6] : memref<16x32xf32, #tpu.memory_space<vmem>>, vector<16x32xf32>
    %c0_7 = arith.constant 0 : index
    %c0_8 = arith.constant 0 : index
    %10 = vector.load %arg6[%c0_7, %c0_8] : memref<32x32xf32, #tpu.memory_space<vmem>>, vector<32x32xf32>
    %cst = arith.constant dense<0.000000e+00> : vector<16x32xf32>
    %11 = tpu.matmul %8, %10, %cst {dimension_numbers = #tpu.dot_dimension_numbers<[1], [1], [0], [0], [0, 0, 1, 0], [], []>} : vector<16x32xf32>, vector<32x32xf32>, vector<16x32xf32> -> vector<16x32xf32>
    %12 = arith.addf %9, %11 : vector<16x32xf32>
    %c0_9 = arith.constant 0 : index
    %c0_10 = arith.constant 0 : index
    %13 = vector.load %arg9[%c0_9, %c0_10] : memref<16x32xf32, #tpu.memory_space<vmem>>, vector<16x32xf32>
    tpu.vector_store %arg9[%c0_9, %c0_10], %12 {strides = array<i32>} : memref<16x32xf32, #tpu.memory_space<vmem>>, vector<16x32xf32>,
    %c0_i32_11 = arith.constant 0 : i32
    %14 = arith.cmpi eq, %arg1, %c0_i32_11 : i32
    %15 = arith.extui %14 : i1 to i32
    %c0_i32_12 = arith.constant 0 : i32
    %16 = arith.cmpi ne, %15, %c0_i32_12 : i32
    scf.if %16 {
      %c0_15 = arith.constant 0 : index
      %c0_16 = arith.constant 0 : index
      %20 = vector.load %arg10[%c0_15, %c0_16] : memref<16x128xf32, #tpu.memory_space<vmem>>, vector<16x128xf32>
      %c0_17 = arith.constant 0 : index
      %c0_18 = arith.constant 0 : index
      %21 = vector.load %arg4[%c0_17, %c0_18] : memref<128x32xf32, #tpu.memory_space<vmem>>, vector<128x32xf32>
      %cst_19 = arith.constant dense<0.000000e+00> : vector<16x128xf32>
      %22 = tpu.matmul %8, %21, %cst_19 {dimension_numbers = #tpu.dot_dimension_numbers<[1], [1], [0], [0], [0, 0, 1, 0], [], []>} : vector<16x32xf32>, vector<128x32xf32>, vector<16x128xf32> -> vector<16x128xf32>
      %23 = arith.addf %20, %22 : vector<16x128xf32>
      %c0_20 = arith.constant 0 : index
      %c0_21 = arith.constant 0 : index
      %24 = vector.load %arg10[%c0_20, %c0_21] : memref<16x128xf32, #tpu.memory_space<vmem>>, vector<16x128xf32>
      tpu.vector_store %arg10[%c0_20, %c0_21], %23 {strides = array<i32>} : memref<16x128xf32, #tpu.memory_space<vmem>>, vector<16x128xf32>,
    } else {
    }
    %c0_i32_13 = arith.constant 0 : i32
    %17 = arith.cmpi eq, %arg2, %c0_i32_13 : i32
    %18 = arith.extui %17 : i1 to i32
    %c0_i32_14 = arith.constant 0 : i32
    %19 = arith.cmpi ne, %18, %c0_i32_14 : i32
    scf.if %19 {
      %c0_15 = arith.constant 0 : index
      %c0_16 = arith.constant 0 : index
      %20 = vector.load %arg10[%c0_15, %c0_16] : memref<16x128xf32, #tpu.memory_space<vmem>>, vector<16x128xf32>
      %c0_17 = arith.constant 0 : index
      %c0_18 = arith.constant 0 : index
      %21 = vector.load %arg5[%c0_17, %c0_18] : memref<32x128xf32, #tpu.memory_space<vmem>>, vector<32x128xf32>
      %cst_19 = arith.constant dense<0.000000e+00> : vector<16x32xf32>
      %22 = tpu.matmul %20, %21, %cst_19 {dimension_numbers = #tpu.dot_dimension_numbers<[1], [1], [0], [0], [0, 0, 1, 0], [], []>} : vector<16x128xf32>, vector<32x128xf32>, vector<16x32xf32> -> vector<16x32xf32>
      %c0_20 = arith.constant 0 : index
      %c0_21 = arith.constant 0 : index
      %23 = vector.load %arg9[%c0_20, %c0_21] : memref<16x32xf32, #tpu.memory_space<vmem>>, vector<16x32xf32>
      %24 = arith.addf %23, %22 : vector<16x32xf32>
      %c0_22 = arith.constant 0 : index
      %c0_23 = arith.constant 0 : index
      %25 = vector.load %arg7[%c0_22, %c0_23] : memref<1x32xf32, #tpu.memory_space<vmem>>, vector<1x32xf32>
      %26 = vector.broadcast %25 : vector<1x32xf32> to vector<16x32xf32>
      %27 = arith.addf %24, %26 : vector<16x32xf32>
      %c0_24 = arith.constant 0 : index
      %c0_25 = arith.constant 0 : index
      %28 = vector.load %arg8[%c0_24, %c0_25] : memref<16x32xf32, #tpu.memory_space<vmem>>, vector<16x32xf32>
      tpu.vector_store %arg8[%c0_24, %c0_25], %27 {strides = array<i32>} : memref<16x32xf32, #tpu.memory_space<vmem>>, vector<16x32xf32>,
    } else {
    }
    return
  }
  func.func @transform_0(%arg0: i32, %arg1: i32, %arg2: i32) -> (i32, i32) {
    %c0_i32 = arith.constant 0 : i32
    return %arg0, %arg2 : i32, i32
  }
  func.func @transform_1(%arg0: i32, %arg1: i32, %arg2: i32) -> (i32, i32) {
    %c0_i32 = arith.constant 0 : i32
    %c0_i32_0 = arith.constant 0 : i32
    return %c0_i32, %arg2 : i32, i32
  }
  func.func @transform_2(%arg0: i32, %arg1: i32, %arg2: i32) -> (i32, i32) {
    %c0_i32 = arith.constant 0 : i32
    %c0_i32_0 = arith.constant 0 : i32
    return %arg1, %c0_i32 : i32, i32
  }
  func.func @transform_3(%arg0: i32, %arg1: i32, %arg2: i32) -> (i32, i32) {
    %c0_i32 = arith.constant 0 : i32
    return %arg1, %arg2 : i32, i32
  }
  func.func @transform_4(%arg0: i32, %arg1: i32, %arg2: i32) -> (i32, i32) {
    %c0_i32 = arith.constant 0 : i32
    %c0_i32_0 = arith.constant 0 : i32
    return %c0_i32, %arg1 : i32, i32
  }
  func.func @transform_5(%arg0: i32, %arg1: i32, %arg2: i32) -> (i32, i32) {
    %c0_i32 = arith.constant 0 : i32
    return %arg0, %arg1 : i32, i32
  }
}

</mosaic_0001>

<llo_original>
// kernel: tpu_custom_call.1
$region0: #{tpu_custom_call.1}
  #allocation0 [shape = 'u32[]', space=smem, size = 0x4, offset = 0x4, fixed_abs, tag = 'smem constant byte address 0x4 - core index']
  #allocation1 [shape = 'u32[72,128]{1,0:T(1,128)}', space=vmem, size = 0x9000, scoped, tag = 'internal scratch']
  #allocation2 [shape = 'f32[16,32]{1,0:T(8,128)}', space=vmem, size = 0x2000, scoped, tag = 'scratch operand']
  #allocation3 [shape = 'f32[16,128]{1,0:T(8,128)}', space=vmem, size = 0x2000, scoped, tag = 'scratch operand']
  %s0 = inlined_call_operand.vmem [shape: f32[16,32], index: 0, kind: input, shape index: {}]
  %s1 = inlined_call_operand.vmem [shape: f32[128,32], index: 1, kind: input, shape index: {}]
  %s2 = inlined_call_operand.vmem [shape: f32[32,128], index: 2, kind: input, shape index: {}]
  %s3 = inlined_call_operand.vmem [shape: f32[32,32], index: 3, kind: input, shape index: {}]
  %s4 = inlined_call_operand.vmem [shape: f32[1,32], index: 4, kind: input, shape index: {}]
  %s5 = inlined_call_operand.hbm [shape: f32[16,32], index: 5, kind: output, shape index: {}]
  %s6 = sld [smem:[#allocation0]]
  $region46: #{tpu_custom_call.1} parent=0
    _
  %s8 = ssub.s32 1, %s6
  %s9 = scalar_select 0, %s8, %s6
  $region1: #{tpu_custom_call.1} parent=0
    #allocation4 [shape = 'u8[8192]{0}', space=vmem, size = 0x2000, scoped, tag = 'output window, operand 0, single buffered']
    #allocation5 [shape = 's32[1]{0}', space=sflag, size = 0x4, scoped, tag = 'scoped memory for tpu_custom_call.1']
    %10 = vsyncpa [#allocation5], 0
    // Predicated region
    $region2: #{tpu_custom_call.1} parent=1 // pred_check
      _
    $region3: #{tpu_custom_call.1} parent=1 // pred_check_branch
      %12 = sbr.rel (0) target = $region5
    $region4: #{tpu_custom_call.1} parent=1 // pred_region
      _
    $region5: #{tpu_custom_call.1} parent=1 // pred_fallthru
      _
    // Predicated region
    $region6: #{tpu_custom_call.1} parent=1 // pred_check
      _
    $region7: #{tpu_custom_call.1} parent=1 // pred_check_branch
      %14 = sbr.rel (0) target = $region9
    $region8: #{tpu_custom_call.1} parent=1 // pred_region
      _
    $region9: #{tpu_custom_call.1} parent=1 // pred_fallthru
      _
    // Predicated region
    $region10: #{tpu_custom_call.1} parent=1 // pred_check
      _
    $region11: #{tpu_custom_call.1} parent=1 // pred_check_branch
      %16 = sbr.rel (0) target = $region13
    $region12: #{tpu_custom_call.1} parent=1 // pred_region
      _
    $region13: #{tpu_custom_call.1} parent=1 // pred_fallthru
      _
    // Predicated region
    $region14: #{tpu_custom_call.1} parent=1 // pred_check
      _
    $region15: #{tpu_custom_call.1} parent=1 // pred_check_branch
      %18 = sbr.rel (0) target = $region17
    $region16: #{tpu_custom_call.1} parent=1 // pred_region
      _
    $region17: #{tpu_custom_call.1} parent=1 // pred_fallthru
      _
    // Predicated region
    $region18: #{tpu_custom_call.1} parent=1 // pred_check
      _
    $region19: #{tpu_custom_call.1} parent=1 // pred_check_branch
      %20 = sbr.rel (0) target = $region21
    $region20: #{tpu_custom_call.1} parent=1 // pred_region
      _
    $region21: #{tpu_custom_call.1} parent=1 // pred_fallthru
      _
    %p21 = scmp.eq.s32.totalorder 0, 0
    // Predicated region
    $region22: #{tpu_custom_call.1} parent=1 // pred_check
      %p22 = pneg %p21
    $region23: #{tpu_custom_call.1} parent=1 // pred_check_branch
      %24 = sbr.rel (%p22) target = $region25
    $region24: #{tpu_custom_call.1} parent=1 // pred_region
      %vm25 = vcmask 261120
      %26 = vst.msk [vmem:[#allocation2] sm:$0xff] %vm25, 0.0
      %27 = vst.msk [vmem:[#allocation2 + $0x8] sm:$0xff] %vm25, 0.0
    $region25: #{tpu_custom_call.1} parent=1 // pred_fallthru
      _
    %p28 = scmp.eq.s32.totalorder 0, 0
    %p29 = pnand %p28, %p21
    %p30 = pneg %p29
    // Predicated region
    $region26: #{tpu_custom_call.1} parent=1 // pred_check
      _
    $region27: #{tpu_custom_call.1} parent=1 // pred_check_branch
      %32 = sbr.rel (%p29) target = $region29
    $region28: #{tpu_custom_call.1} parent=1 // pred_region
      %33 = vst [vmem:[#allocation3] sm:$0xff] 0.0
      %34 = vst [vmem:[#allocation3 + $0x8] sm:$0xff] 0.0
    $region29: #{tpu_custom_call.1} parent=1 // pred_fallthru
      _
    %v35 = vld [vmem:[%s0] sm:$0xff]
    %v36 = vld [vmem:[%s0 + $0x8] sm:$0xff]
    %v37 = vld [vmem:[#allocation2] sm:$0xff]
    %v38 = vld [vmem:[#allocation2 + $0x8] sm:$0xff]
    %v39 = vld [vmem:[%s3] sm:$0xff]
    %v40 = vld [vmem:[%s3 + $0x8] sm:$0xff]
    %v41 = vld [vmem:[%s3 + $0x10] sm:$0xff]
    %v42 = vld [vmem:[%s3 + $0x18] sm:$0xff]
    %vm43 = vcmask 261120
    %v45 = vsel %vm43, %v35, 0
    %v48 = vsel %vm43, %v36, 0
    %v51 = vsel %vm43, %v39, 0
    %v54 = vsel %vm43, %v40, 0
    %v57 = vsel %vm43, %v41, 0
    %v60 = vsel %vm43, %v42, 0
    %62 = vmatpush.xpose.msra.mxu0 0.0
    %63 = vmatpush.xpose.msra.mxu0 0.0
    %64 = vmatpush.xpose.msra.mxu0 0.0
    %65 = vmatpush.xpose.msra.mxu0 0.0
    %66 = vmatpush.xpose.msra.mxu0 0.0
    %67 = vmatpush.xpose.msra.mxu0 0.0
    %68 = vmatpush.xpose.msra.mxu0 0.0
    %69 = vmatpush.xpose.msra.mxu0 0.0
    %70 = vmatpush.xpose.msra.mxu0 0.0
    %71 = vmatpush.xpose.msra.mxu0 0.0
    %72 = vmatpush.xpose.msra.mxu0 0.0
    %73 = vmatpush.xpose.msra.mxu0 0.0
    %74 = vmatpush.xpose.msra.mxu0 %v60
    %75 = vmatpush.xpose.msra.mxu0 %v57
    %76 = vmatpush.xpose.msra.mxu0 %v54
    %77 = vmatpush.xpose.msra.mxu0 %v51
    %78 = vmatmul.f32.gmra.mxu0 %v45
    %v79 = vpop.f32.mrf.mxu0
    %v80 = vadd.f32 0.0, %v79
    %81 = vmatmul.f32.gmra.mxu0 %v48
    %v82 = vpop.f32.mrf.mxu0
    %v83 = vadd.f32 0.0, %v82
    %84 = vdwg.mxu0
    %v85 = vadd.f32 %v37, %v80
    %v86 = vadd.f32 %v38, %v83
    %87 = vst.msk [vmem:[#allocation2] sm:$0xff] %vm43, %v85
    %88 = vst.msk [vmem:[#allocation2 + $0x8] sm:$0xff] %vm43, %v86
    // Predicated region
    $region30: #{tpu_custom_call.1} parent=1 // pred_check
      %p89 = pneg %p28
    $region31: #{tpu_custom_call.1} parent=1 // pred_check_branch
      %91 = sbr.rel (%p89) target = $region33
    $region32: #{tpu_custom_call.1} parent=1 // pred_region
      %v92 = vld [vmem:[#allocation3] sm:$0xff]
      %v93 = vld [vmem:[#allocation3 + $0x8] sm:$0xff]
      %v94 = vld [vmem:[%s1] sm:$0xff]
      %v95 = vld [vmem:[%s1 + $0x8] sm:$0xff]
      %v96 = vld [vmem:[%s1 + $0x10] sm:$0xff]
      %v97 = vld [vmem:[%s1 + $0x18] sm:$0xff]
      %v98 = vld [vmem:[%s1 + $0x20] sm:$0xff]
      %v99 = vld [vmem:[%s1 + $0x28] sm:$0xff]
      %v100 = vld [vmem:[%s1 + $0x30] sm:$0xff]
      %v101 = vld [vmem:[%s1 + $0x38] sm:$0xff]
      %v102 = vld [vmem:[%s1 + $0x40] sm:$0xff]
      %v103 = vld [vmem:[%s1 + $0x48] sm:$0xff]
      %v104 = vld [vmem:[%s1 + $0x50] sm:$0xff]
      %v105 = vld [vmem:[%s1 + $0x58] sm:$0xff]
      %v106 = vld [vmem:[%s1 + $0x60] sm:$0xff]
      %v107 = vld [vmem:[%s1 + $0x68] sm:$0xff]
      %v108 = vld [vmem:[%s1 + $0x70] sm:$0xff]
      %v109 = vld [vmem:[%s1 + $0x78] sm:$0xff]
      %v111 = vsel %vm43, %v94, 0
      %v114 = vsel %vm43, %v95, 0
      %v117 = vsel %vm43, %v96, 0
      %v120 = vsel %vm43, %v97, 0
      %v123 = vsel %vm43, %v98, 0
      %v126 = vsel %vm43, %v99, 0
      %v129 = vsel %vm43, %v100, 0
      %v132 = vsel %vm43, %v101, 0
      %v135 = vsel %vm43, %v102, 0
      %v138 = vsel %vm43, %v103, 0
      %v141 = vsel %vm43, %v104, 0
      %v144 = vsel %vm43, %v105, 0
      %v147 = vsel %vm43, %v106, 0
      %v150 = vsel %vm43, %v107, 0
      %v153 = vsel %vm43, %v108, 0
      %v156 = vsel %vm43, %v109, 0
      %158 = vmatpush.xpose.msra.mxu0 %v156
      %159 = vmatpush.xpose.msra.mxu0 %v153
      %160 = vmatpush.xpose.msra.mxu0 %v150
      %161 = vmatpush.xpose.msra.mxu0 %v147
      %162 = vmatpush.xpose.msra.mxu0 %v144
      %163 = vmatpush.xpose.msra.mxu0 %v141
      %164 = vmatpush.xpose.msra.mxu0 %v138
      %165 = vmatpush.xpose.msra.mxu0 %v135
      %166 = vmatpush.xpose.msra.mxu0 %v132
      %167 = vmatpush.xpose.msra.mxu0 %v129
      %168 = vmatpush.xpose.msra.mxu0 %v126
      %169 = vmatpush.xpose.msra.mxu0 %v123
      %170 = vmatpush.xpose.msra.mxu0 %v120
      %171 = vmatpush.xpose.msra.mxu0 %v117
      %172 = vmatpush.xpose.msra.mxu0 %v114
      %173 = vmatpush.xpose.msra.mxu0 %v111
      %174 = vmatmul.f32.gmra.mxu0 %v45
      %v175 = vpop.f32.mrf.mxu0
      %v176 = vadd.f32 0.0, %v175
      %177 = vmatmul.f32.gmra.mxu0 %v48
      %v178 = vpop.f32.mrf.mxu0
      %v179 = vadd.f32 0.0, %v178
      %180 = vdwg.mxu0
      %v181 = vadd.f32 %v92, %v176
      %v182 = vadd.f32 %v93, %v179
      %183 = vst [vmem:[#allocation3] sm:$0xff] %v181
      %184 = vst [vmem:[#allocation3 + $0x8] sm:$0xff] %v182
    $region33: #{tpu_custom_call.1} parent=1 // pred_fallthru
      _
    // Predicated region
    $region34: #{tpu_custom_call.1} parent=1 // pred_check
      %p185 = pneg %p21
    $region35: #{tpu_custom_call.1} parent=1 // pred_check_branch
      %187 = sbr.rel (%p185) target = $region37
    $region36: #{tpu_custom_call.1} parent=1 // pred_region
      %v188 = vld [vmem:[#allocation3] sm:$0xff]
      %v189 = vld [vmem:[#allocation3 + $0x8] sm:$0xff]
      %v190 = vld [vmem:[%s2] sm:$0xff]
      %v191 = vld [vmem:[%s2 + $0x8] sm:$0xff]
      %v192 = vld [vmem:[%s2 + $0x10] sm:$0xff]
      %v193 = vld [vmem:[%s2 + $0x18] sm:$0xff]
      %194 = vmatpush.xpose.msra.mxu0 0.0
      %195 = vmatpush.xpose.msra.mxu0 0.0
      %196 = vmatpush.xpose.msra.mxu0 0.0
      %197 = vmatpush.xpose.msra.mxu0 0.0
      %198 = vmatpush.xpose.msra.mxu0 0.0
      %199 = vmatpush.xpose.msra.mxu0 0.0
      %200 = vmatpush.xpose.msra.mxu0 0.0
      %201 = vmatpush.xpose.msra.mxu0 0.0
      %202 = vmatpush.xpose.msra.mxu0 0.0
      %203 = vmatpush.xpose.msra.mxu0 0.0
      %204 = vmatpush.xpose.msra.mxu0 0.0
      %205 = vmatpush.xpose.msra.mxu0 0.0
      %206 = vmatpush.xpose.msra.mxu0 %v193
      %207 = vmatpush.xpose.msra.mxu0 %v192
      %208 = vmatpush.xpose.msra.mxu0 %v191
      %209 = vmatpush.xpose.msra.mxu0 %v190
      %210 = vmatmul.f32.gmra.mxu0 %v188
      %v211 = vpop.f32.mrf.mxu0
      %v212 = vadd.f32 0.0, %v211
      %213 = vmatmul.f32.gmra.mxu0 %v189
      %v214 = vpop.f32.mrf.mxu0
      %v215 = vadd.f32 0.0, %v214
      %216 = vdwg.mxu0
      %v217 = vld [vmem:[#allocation2] sm:$0xff]
      %v218 = vld [vmem:[#allocation2 + $0x8] sm:$0xff]
      %v219 = vadd.f32 %v217, %v212
      %v220 = vadd.f32 %v218, %v215
      %v221 = vld [vmem:[%s4] sm:$0x1]
      %v223 = vperm.slane %v221, 0
      %v225 = vadd.f32 %v219, %v223
      %v226 = vadd.f32 %v220, %v223
      %227 = vst.msk [vmem:[#allocation4] sm:$0xff] %vm43, %v225
      %228 = vst.msk [vmem:[#allocation4 + $0x8] sm:$0xff] %vm43, %v226
    $region37: #{tpu_custom_call.1} parent=1 // pred_fallthru
      _
    // Predicated region
    $region38: #{tpu_custom_call.1} parent=1 // pred_check
      _
    $region39: #{tpu_custom_call.1} parent=1 // pred_check_branch
      %230 = sbr.rel (0) target = $region41
    $region40: #{tpu_custom_call.1} parent=1 // pred_region
      %232 = vsyncadd [#allocation5], 0
      %s233 = sshll.u32 [#allocation4], 4
      %s234 = int_to_ptr.vmem [resolvable:$true] %s233
      %s235 = sshll.u32 %s5, 4
      %s236 = int_to_ptr.hbm [resolvable:$true] %s235
      %241 = dma.vmem_to_hbm [thread:$0]  %s234, 256, %s236, [#allocation5], 128, 128, 8
    $region41: #{tpu_custom_call.1} parent=1 // pred_fallthru
      _
    // Predicated region
    $region42: #{tpu_custom_call.1} parent=1 // pred_check
      _
    $region43: #{tpu_custom_call.1} parent=1 // pred_check_branch
      %243 = sbr.rel (0) target = $region45
    $region44: #{tpu_custom_call.1} parent=1 // pred_region
      %245 = dma.done [#allocation5], 256
    $region45: #{tpu_custom_call.1} parent=1 // pred_fallthru
      _
    %246 = vsyncpa [#allocation5], 1

</llo_original>
